<compile_context>
chip_gen: v7x
topology: tpu7x:2x2x1
jax: 0.10.0
libtpu: 0.0.40
codegen_flags: <defaults>
</compile_context>

<pallas_src>
import jax
import jax.numpy as jnp
from jax.experimental import pallas as pl
from jax.experimental.pallas import tpu as pltpu

NEG_BIG = -1e30  # large *finite* negative for pre-softmax masking

_ENC_WEIGHT_NAMES = ("wqkv", "bqkv", "wo", "bo", "g1", "be1",
                     "w1", "b1", "w2", "b2", "g2", "be2")
_MHA_WEIGHT_NAMES = ("wq", "bq", "wkv", "bkv", "wo", "bo")

_VMEM_LIMIT = None


def _round_up(x, m):
    return (x + m - 1) // m * m


def _const_index_map(ndim):
    return lambda n, _nd=ndim: (0,) * _nd


def _pick_batch_block(seq_len, target_rows=256, cap=32):
    # flattened (batch_block * seq_len) rows >= ~256 keeps the MXU M dim tall
    # on v6e/v7x (256x256 arrays); cap bounds the VMEM-resident block.
    bb = _round_up(pl.cdiv(target_rows, seq_len), 8)
    return max(8, min(cap, bb))


def _compiler_params():
    """dimension_semantics=('parallel',) + chip-aware VMEM limit."""
    global _VMEM_LIMIT
    if _VMEM_LIMIT is None:
        try:
            cap = int(getattr(pltpu.get_tpu_info(), "vmem_capacity_bytes", 0))
        except Exception:  # pragma: no cover - defensive, keep compiling
            cap = 0
        cap = cap or (64 << 20)
        _VMEM_LIMIT = max(min((cap * 3) // 4, 100 << 20), 32 << 20)
    return pltpu.CompilerParams(
        dimension_semantics=("parallel",),
        vmem_limit_bytes=_VMEM_LIMIT,
    )


# --------------------------------------------------------------------------
# In-kernel helpers (operate on values; no pallas_call here)
# --------------------------------------------------------------------------
def _layernorm(h, g, be, eps=1e-5):
    mu = jnp.mean(h, axis=-1, keepdims=True)
    xc = h - mu
    var = jnp.mean(xc * xc, axis=-1, keepdims=True)   # two-pass: var >= 0
    return xc * jax.lax.rsqrt(var + eps) * g + be


def _attention_core(q16, k16, v16, mask_add, head_count, dh):
    """Batched multi-head attention core.

    q16: (B, Lq, D) bf16, k16/v16: (B, Lk, D) bf16, mask_add: None or f32
    broadcastable to (B, Lq, Lk). Returns (B, Lq, D) f32 (heads concatenated).
    """
    scale = dh ** -0.5
    outs = []
    for h in range(head_count):                       # small static head loop
        sl = slice(h * dh, (h + 1) * dh)
        s = jnp.einsum('bqd,bkd->bqk', q16[:, :, sl], k16[:, :, sl],
                       preferred_element_type=jnp.float32) * scale
        if mask_add is not None:
            s = s + mask_add
        m = jnp.max(s, axis=-1, keepdims=True)
        p = jnp.exp(s - m)
        p = p * pl.reciprocal(jnp.sum(p, axis=-1, keepdims=True), approx=True)
        outs.append(jnp.einsum('bqk,bkd->bqd', p.astype(jnp.bfloat16),
                               v16[:, :, sl],
                               preferred_element_type=jnp.float32))
    return jnp.concatenate(outs, axis=-1)             # (B, Lq, D) f32


# --------------------------------------------------------------------------
# Kernel 1: dense  y = x @ W + b  (optionally zero masked rows), row-tiled
# --------------------------------------------------------------------------
def _dense_kernel(x_ref, w_ref, b_ref, o_ref):
    o_ref[...] = (jnp.dot(x_ref[...].astype(jnp.bfloat16), w_ref[...],
                          preferred_element_type=jnp.float32) + b_ref[...])


def _dense_keep_kernel(x_ref, keep_ref, w_ref, b_ref, o_ref):
    y = (jnp.dot(x_ref[...].astype(jnp.bfloat16), w_ref[...],
                 preferred_element_type=jnp.float32) + b_ref[...])
    o_ref[...] = y * keep_ref[...]


def dense(x2d, w, b, keep=None):
    M, Din = x2d.shape
    Dout = w.shape[1]
    # >= 2 row blocks (software pipelining + v7x dual-TC), multiple-of-8 rows.
    block_m = min(2048, _round_up(pl.cdiv(M, 2), 8))
    Mp = _round_up(M, block_m)
    if Mp != M:
        x2d = jnp.pad(x2d, ((0, Mp - M), (0, 0)))
        if keep is not None:
            keep = jnp.pad(keep, ((0, Mp - M), (0, 0)))

    in_specs = [pl.BlockSpec((block_m, Din), lambda n: (n, 0))]
    args = [x2d]
    if keep is not None:
        in_specs.append(pl.BlockSpec((block_m, 1), lambda n: (n, 0)))
        args.append(keep)
    # NOTE: constant-index weight blocks could be single-buffered
    # (pipeline_mode=pl.Buffered(1)) to save VMEM on v7x; left at the default
    # for lowering compatibility (weights here are tiny anyway).
    in_specs += [pl.BlockSpec(w.shape, _const_index_map(2)),
                 pl.BlockSpec(b.shape, _const_index_map(2))]
    args += [w, b]

    kernel = _dense_keep_kernel if keep is not None else _dense_kernel
    out = pl.pallas_call(
        kernel,
        out_shape=jax.ShapeDtypeStruct((Mp, Dout), jnp.float32),
        grid=(Mp // block_m,),
        in_specs=in_specs,
        out_specs=pl.BlockSpec((block_m, Dout), lambda n: (n, 0)),
        compiler_params=_compiler_params(),
    )(*args)
    return out[:M] if Mp != M else out


# --------------------------------------------------------------------------
# Kernel 2: fused Transformer-encoder layer (MHA + add/LN + FF + add/LN)
# --------------------------------------------------------------------------
def _make_encoder_layer_kernel(head_count, use_mask):
    def kernel(*refs):
        if use_mask:
            x_ref, m_ref = refs[0], refs[1]
            w = refs[2:]
        else:
            x_ref, m_ref = refs[0], None
            w = refs[1:]
        (wqkv, bqkv, wo, bo, g1, be1, w1, b1, w2, b2, g2, be2, o_ref) = w

        Bb, L, D = x_ref.shape
        dh = D // head_count
        bf16 = jnp.bfloat16

        x = x_ref[...]                                 # (Bb, L, D) f32
        x2 = x.reshape(Bb * L, D)
        mask_add = (m_ref[...] * NEG_BIG) if use_mask else None   # (Bb, 1, L)

        # fused QKV projection on the flattened slab: (Bb*L, D) @ (D, 3D)
        qkv = (jnp.dot(x2.astype(bf16), wqkv[...],
                       preferred_element_type=jnp.float32) + bqkv[...])
        qkv16 = qkv.astype(bf16)
        q16 = qkv16[:, 0 * D:1 * D].reshape(Bb, L, D)
        k16 = qkv16[:, 1 * D:2 * D].reshape(Bb, L, D)
        v16 = qkv16[:, 2 * D:3 * D].reshape(Bb, L, D)

        attn = _attention_core(q16, k16, v16, mask_add, head_count, dh)
        attn = (jnp.dot(attn.reshape(Bb * L, D).astype(bf16), wo[...],
                        preferred_element_type=jnp.float32) + bo[...])

        h1 = _layernorm(x2 + attn, g1[...], be1[...])
        f = jnp.dot(h1.astype(bf16), w1[...],
                    preferred_element_type=jnp.float32) + b1[...]
        f = jnp.maximum(f, 0.0)
        f = jnp.dot(f.astype(bf16), w2[...],
                    preferred_element_type=jnp.float32) + b2[...]
        o_ref[...] = _layernorm(h1 + f, g2[...], be2[...]).reshape(Bb, L, D)
    return kernel


def encoder_layer_fwd(x, key_mask, params, head_count, batch_block):
    Np, L, D = x.shape
    use_mask = key_mask is not None
    kernel = _make_encoder_layer_kernel(head_count, use_mask)

    in_specs = [pl.BlockSpec((batch_block, L, D), lambda n: (n, 0, 0))]
    args = [x]
    if use_mask:
        in_specs.append(pl.BlockSpec((batch_block, 1, L), lambda n: (n, 0, 0)))
        args.append(key_mask)                          # (Np, 1, L) float
    for nm in _ENC_WEIGHT_NAMES:
        a = params[nm]
        in_specs.append(pl.BlockSpec(a.shape, _const_index_map(a.ndim)))
        args.append(a)

    return pl.pallas_call(
        kernel,
        out_shape=jax.ShapeDtypeStruct((Np, L, D), jnp.float32),
        grid=(Np // batch_block,),
        in_specs=in_specs,
        out_specs=pl.BlockSpec((batch_block, L, D), lambda n: (n, 0, 0)),
        compiler_params=_compiler_params(),
    )(*args)


# --------------------------------------------------------------------------
# Kernel 3: fused policy step
#   fleet-MHA + vehicle gather + veh-MHA + scores + tanh + mask + log-softmax
# --------------------------------------------------------------------------
def _make_step_kernel(head_count, inv_sqrt_d, tanh_xplor):
    def kernel(veh_ref, ce_ref, cr_ref, fm_ref, am_ref, oh_ref,
               fwq, fbq, fwkv, fbkv, fwo, fbo,
               vwq, vbq, vwkv, vbkv, vwo, vbo, o_ref):
        bf16 = jnp.bfloat16
        Bb, Lv, Dv = veh_ref.shape
        _, Lc, D = ce_ref.shape
        dh = D // head_count

        veh = veh_ref[...]                              # (Bb, Lv, Dv)
        ce = ce_ref[...]                                # (Bb, Lc, D)
        cr = cr_ref[...]                                # (Bb, Lc, D)
        fmask_add = fm_ref[...] * NEG_BIG               # (Bb, Lv, Lc) additive

        # ---- fleet attention: Q from vehicles, K/V from customer encodings --
        q = (jnp.dot(veh.reshape(Bb * Lv, Dv).astype(bf16), fwq[...],
                     preferred_element_type=jnp.float32) + fbq[...])
        kv = (jnp.dot(ce.reshape(Bb * Lc, D).astype(bf16), fwkv[...],
                      preferred_element_type=jnp.float32) + fbkv[...])
        q16 = q.astype(bf16).reshape(Bb, Lv, D)
        kv16 = kv.astype(bf16)
        k16 = kv16[:, :D].reshape(Bb, Lc, D)
        v16 = kv16[:, D:].reshape(Bb, Lc, D)
        attn = _attention_core(q16, k16, v16, fmask_add, head_count, dh)
        fleet_repr = (jnp.dot(attn.reshape(Bb * Lv, D).astype(bf16), fwo[...],
                              preferred_element_type=jnp.float32)
                      + fbo[...]).reshape(Bb, Lv, D)

        # ---- gather acting vehicle via one-hot reduce (no dynamic slicing) --
        onehot = oh_ref[...]                            # (Bb, Lv)
        veh_query = jnp.sum(fleet_repr * onehot[:, :, None], axis=1)  # (Bb, D)

        # ---- vehicle attention: Q = acting vehicle, K/V = fleet repr --------
        qv = (jnp.dot(veh_query.astype(bf16), vwq[...],
                      preferred_element_type=jnp.float32) + vbq[...])  # (Bb,D)
        kvv = (jnp.dot(fleet_repr.reshape(Bb * Lv, D).astype(bf16), vwkv[...],
                       preferred_element_type=jnp.float32) + vbkv[...])
        qv16 = qv.astype(bf16).reshape(Bb, 1, D)
        kvv16 = kvv.astype(bf16)
        kf16 = kvv16[:, :D].reshape(Bb, Lv, D)
        vf16 = kvv16[:, D:].reshape(Bb, Lv, D)
        vattn = _attention_core(qv16, kf16, vf16, None, head_count, dh)
        veh_repr = (jnp.dot(vattn.reshape(Bb, D).astype(bf16), vwo[...],
                            preferred_element_type=jnp.float32)
                    + vbo[...])                          # (Bb, D)

        # ---- compatibility + tanh exploration + mask + log-softmax ---------
        compat = jnp.einsum('bqd,bcd->bqc', veh_repr.reshape(Bb, 1, D), cr,
                            preferred_element_type=jnp.float32).reshape(Bb, Lc)
        compat = compat * inv_sqrt_d
        if tanh_xplor is not None:
            compat = tanh_xplor * jnp.tanh(compat)
        compat = compat + am_ref[...] * NEG_BIG          # finite mask -> no NaN
        mx = jnp.max(compat, axis=-1, keepdims=True)
        lse = jnp.log(jnp.sum(jnp.exp(compat - mx), axis=-1, keepdims=True))
        o_ref[...] = compat - mx - lse                   # lane-dense (Bb, Lc)
    return kernel


def step_fwd(veh, cust_enc, cust_repr, fleet_mask, action_mask, onehot,
             fleet_p, veh_p, head_count, inv_sqrt_d, tanh_xplor, batch_block):
    Np, Lv, Dv = veh.shape
    _, Lc, D = cust_enc.shape
    kernel = _make_step_kernel(head_count, inv_sqrt_d, tanh_xplor)

    in_specs = [
        pl.BlockSpec((batch_block, Lv, Dv), lambda n: (n, 0, 0)),
        pl.BlockSpec((batch_block, Lc, D), lambda n: (n, 0, 0)),
        pl.BlockSpec((batch_block, Lc, D), lambda n: (n, 0, 0)),
        pl.BlockSpec((batch_block, Lv, Lc), lambda n: (n, 0, 0)),
        pl.BlockSpec((batch_block, Lc), lambda n: (n, 0)),
        pl.BlockSpec((batch_block, Lv), lambda n: (n, 0)),
    ]
    args = [veh, cust_enc, cust_repr, fleet_mask, action_mask, onehot]
    for pset in (fleet_p, veh_p):
        for nm in _MHA_WEIGHT_NAMES:
            a = pset[nm]
            in_specs.append(pl.BlockSpec(a.shape, _const_index_map(a.ndim)))
            args.append(a)

    return pl.pallas_call(
        kernel,
        out_shape=jax.ShapeDtypeStruct((Np, Lc), jnp.float32),
        grid=(Np // batch_block,),
        in_specs=in_specs,
        out_specs=pl.BlockSpec((batch_block, Lc), lambda n: (n, 0)),
        compiler_params=_compiler_params(),
    )(*args)


# --------------------------------------------------------------------------
# Deterministic parameter init (shapes follow the PyTorch module __init__)
# --------------------------------------------------------------------------
def _init_linear(key, din, dout):
    kw, kb = jax.random.split(key)
    lim = 1.0 / (din ** 0.5)
    w = jax.random.uniform(kw, (din, dout), jnp.float32, -lim, lim)
    b = jax.random.uniform(kb, (1, dout), jnp.float32, -lim, lim)
    return w, b


def _init_mha(key, q_size, kv_size, d_model):
    """Lane-dense MHA weights: separate Q, fused K|V, full (D, D) out-proj."""
    ks = jax.random.split(key, 4)
    wq, bq = _init_linear(ks[0], q_size, d_model)
    wk, bk = _init_linear(ks[1], kv_size, d_model)
    wv, bv = _init_linear(ks[2], kv_size, d_model)
    wo, bo = _init_linear(ks[3], d_model, d_model)
    return dict(
        wq=wq.astype(jnp.bfloat16), bq=bq,
        wkv=jnp.concatenate([wk, wv], axis=1).astype(jnp.bfloat16),
        bkv=jnp.concatenate([bk, bv], axis=1),
        wo=wo.astype(jnp.bfloat16), bo=bo)


def _init_encoder_layer(key, d_model, ff_size):
    ks = jax.random.split(key, 6)
    wq, bq = _init_linear(ks[0], d_model, d_model)
    wk, bk = _init_linear(ks[1], d_model, d_model)
    wv, bv = _init_linear(ks[2], d_model, d_model)
    wo, bo = _init_linear(ks[3], d_model, d_model)
    w1, b1 = _init_linear(ks[4], d_model, ff_size)
    w2, b2 = _init_linear(ks[5], ff_size, d_model)
    return dict(
        wqkv=jnp.concatenate([wq, wk, wv], axis=1).astype(jnp.bfloat16),
        bqkv=jnp.concatenate([bq, bk, bv], axis=1),
        wo=wo.astype(jnp.bfloat16), bo=bo,
        g1=jnp.ones((1, d_model), jnp.float32),
        be1=jnp.zeros((1, d_model), jnp.float32),
        w1=w1.astype(jnp.bfloat16), b1=b1,
        w2=w2.astype(jnp.bfloat16), b2=b2,
        g2=jnp.ones((1, d_model), jnp.float32),
        be2=jnp.zeros((1, d_model), jnp.float32))


# --------------------------------------------------------------------------
# AttentionLearner (forward-pass semantics; params built in-script)
# --------------------------------------------------------------------------
class AttentionLearnerPallas:
    def __init__(self, cust_feat_size, veh_state_size, model_size=128,
                 layer_count=3, head_count=8, ff_size=512, tanh_xplor=10.0,
                 key=None):
        assert model_size % head_count == 0
        key = jax.random.PRNGKey(0) if key is None else key
        self.model_size = model_size
        self.head_count = head_count
        self.inv_sqrt_d = model_size ** (-0.5)
        self.tanh_xplor = tanh_xplor
        ks = jax.random.split(key, 4 + layer_count)
        emb_w, emb_b = _init_linear(ks[0], cust_feat_size, model_size)
        self.emb_w, self.emb_b = emb_w.astype(jnp.bfloat16), emb_b
        self.enc_layers = [_init_encoder_layer(ks[1 + i], model_size, ff_size)
                           for i in range(layer_count)]
        self.fleet_attention = _init_mha(ks[1 + layer_count], veh_state_size,
                                         model_size, model_size)
        self.veh_attention = _init_mha(ks[2 + layer_count], model_size,
                                       model_size, model_size)
        proj_w, proj_b = _init_linear(ks[3 + layer_count], model_size,
                                      model_size)
        self.proj_w, self.proj_b = proj_w.astype(jnp.bfloat16), proj_b
        self._N = self._Np = self._bb = None

    # ---- _encode_customers -------------------------------------------------
    def _encode_customers(self, customers, mask=None):
        N, Lc, Dc = customers.shape
        D = self.model_size
        bb = _pick_batch_block(Lc)
        Np = max(2 * bb, _round_up(N, bb))     # pad batch; >= 2 grid steps
        self._N, self._Np, self._bb = N, Np, bb
        if Np != N:
            customers = jnp.pad(customers, ((0, Np - N), (0, 0), (0, 0)))
            if mask is not None:
                mask = jnp.pad(mask, ((0, Np - N), (0, 0)))

        x2d = customers.astype(jnp.float32).reshape(Np * Lc, Dc)
        keep = None
        key_mask = None
        if mask is not None:
            # Matches PyTorch: masked customers are zeroed + key-masked only
            # (they still act as queries and go through residual/LN).
            mf = mask.astype(jnp.float32)
            keep = (1.0 - mf).reshape(Np * Lc, 1)     # 1 = keep, 0 = hidden
            key_mask = mf.reshape(Np, 1, Lc)          # additive-masked in-kernel

        cust_emb = dense(x2d, self.emb_w, self.emb_b, keep).reshape(Np, Lc, D)
        x = cust_emb
        for layer in self.enc_layers:
            x = encoder_layer_fwd(x, key_mask, layer, self.head_count, bb)
        self.cust_enc = x                                     # (Np, Lc, D)
        cust_repr = dense(x.reshape(Np * Lc, D), self.proj_w, self.proj_b, keep)
        self.cust_repr = cust_repr.reshape(Np, Lc, D)

    # ---- step (fused _repr_vehicle + _score_customers + _get_logp) ---------
    def step(self, vehicles_obs, cur_veh_idx, mask, action_mask,
             deterministic=True, key=None):
        N, Lv, _ = vehicles_obs.shape
        assert N == self._N, "step() batch must match _encode_customers()"
        Np, bb = self._Np, self._bb
        Lc = self.cust_enc.shape[1]

        def pad_batch(a):
            if Np == N:
                return a
            return jnp.pad(a, ((0, Np - N),) + ((0, 0),) * (a.ndim - 1))

        veh = pad_batch(vehicles_obs.astype(jnp.float32))
        fm = pad_batch(mask.astype(jnp.float32).reshape(N, Lv, Lc))
        am = pad_batch(action_mask.astype(jnp.float32).reshape(N, Lc))
        oh = pad_batch(jax.nn.one_hot(cur_veh_idx[:, 0], Lv,
                                      dtype=jnp.float32))       # (Np, Lv)

        logp = step_fwd(veh, self.cust_enc, self.cust_repr, fm, am, oh,
                        self.fleet_attention, self.veh_attention,
                        self.head_count, self.inv_sqrt_d, self.tanh_xplor,
                        bb)[:N]                                  # (N, Lc)

        if deterministic:
            cust_idx = jnp.argmax(logp, axis=1, keepdims=True)
        else:
            key = jax.random.PRNGKey(1) if key is None else key
            cust_idx = jax.random.categorical(key, logp, axis=1)[:, None]
        chosen_logp = jnp.take_along_axis(logp, cust_idx, axis=1)
        return cust_idx, chosen_logp


# --------------------------------------------------------------------------
if __name__ == "__main__":
    key = jax.random.PRNGKey(0)
    N, Lc, Lv = 2, 8, 4            # batch, customers, vehicles
    cust_feat, veh_state = 5, 4
    model_size, head_count, ff_size, layer_count = 32, 4, 64, 2

    model = AttentionLearnerPallas(cust_feat, veh_state, model_size=model_size,
                                   layer_count=layer_count,
                                   head_count=head_count, ff_size=ff_size,
                                   tanh_xplor=10.0, key=key)

    k1, k2, k3, k4, k5 = jax.random.split(key, 5)
    customers = jax.random.normal(k1, (N, Lc, cust_feat), jnp.float32)
    vehicles = jax.random.normal(k2, (N, Lv, veh_state), jnp.float32)
    cur_veh_idx = jnp.zeros((N, 1), jnp.int32)
    # 1 = infeasible; keep column 0 feasible so softmax rows are well defined
    fleet_mask = (jax.random.uniform(k3, (N, Lv, Lc)) < 0.2).astype(jnp.float32)
    fleet_mask = fleet_mask.at[:, :, 0].set(0.0)
    action_mask = (jax.random.uniform(k4, (N, 1, Lc)) < 0.2).astype(jnp.float32)
    action_mask = action_mask.at[:, :, 0].set(0.0)

    # unmasked encode + step (no mask operand is DMA'd in this path)
    model._encode_customers(customers)
    cust_idx, logp = model.step(vehicles, cur_veh_idx, fleet_mask, action_mask,
                                deterministic=True)
    jax.block_until_ready((cust_idx, logp))
    assert cust_idx.shape == (N, 1) and logp.shape == (N, 1)
    assert bool(jnp.all(jnp.isfinite(logp)))

    # masked encode path (exercises the key-masked encoder-layer variant)
    cust_mask = (jax.random.uniform(k5, (N, Lc)) < 0.25).astype(jnp.float32)
    cust_mask = cust_mask.at[:, 0].set(0.0)
    model._encode_customers(customers, cust_mask)
    cust_idx2, logp2 = model.step(vehicles, cur_veh_idx, fleet_mask,
                                  action_mask, deterministic=True)
    jax.block_until_ready((cust_idx2, logp2))
    assert bool(jnp.all(jnp.isfinite(logp2)))

    print("KERNEL_OK")
</pallas_src>

<mosaic_0001>
module attributes {stable_mosaic.version = 11 : i64} {
  func.func @_dense_kernel(%arg0: i32, %arg1: memref<256x5xf32, #tpu.memory_space<vmem>>, %arg2: memref<5x32xbf16, #tpu.memory_space<vmem>>, %arg3: memref<1x32xf32, #tpu.memory_space<vmem>>, %arg4: memref<256x32xf32, #tpu.memory_space<vmem>>) attributes {dimension_semantics = [#tpu.dimension_semantics<parallel>], iteration_bounds = array<i64: 2>, scalar_prefetch = 0 : i64, scratch_operands = 0 : i64, tpu.core_type = #tpu.core_type<tc>, window_params = [{transform_indices = @transform_0, window_bounds = array<i64: 256, 5>}, {pipeline_mode = #tpu.pipeline_mode<synchronous>, transform_indices = @transform_1, window_bounds = array<i64: 5, 32>}, {pipeline_mode = #tpu.pipeline_mode<synchronous>, transform_indices = @transform_2, window_bounds = array<i64: 1, 32>}, {transform_indices = @transform_3, window_bounds = array<i64: 256, 32>}]} {
    %c0 = arith.constant 0 : index
    %c0_0 = arith.constant 0 : index
    %0 = vector.load %arg1[%c0, %c0_0] : memref<256x5xf32, #tpu.memory_space<vmem>>, vector<256x5xf32>
    %1 = arith.truncf %0 : vector<256x5xf32> to vector<256x5xbf16>
    %c0_1 = arith.constant 0 : index
    %c0_2 = arith.constant 0 : index
    %2 = vector.load %arg2[%c0_1, %c0_2] : memref<5x32xbf16, #tpu.memory_space<vmem>>, vector<5x32xbf16>
    %cst = arith.constant dense<0.000000e+00> : vector<256x32xf32>
    %3 = tpu.matmul %1, %2, %cst {dimension_numbers = #tpu.dot_dimension_numbers<[1], [0], [0], [1], [0, 0, 1, 1], [], []>} : vector<256x5xbf16>, vector<5x32xbf16>, vector<256x32xf32> -> vector<256x32xf32>
    %c0_3 = arith.constant 0 : index
    %c0_4 = arith.constant 0 : index
    %4 = vector.load %arg3[%c0_3, %c0_4] : memref<1x32xf32, #tpu.memory_space<vmem>>, vector<1x32xf32>
    %5 = vector.broadcast %4 : vector<1x32xf32> to vector<256x32xf32>
    %6 = arith.addf %3, %5 : vector<256x32xf32>
    %c0_5 = arith.constant 0 : index
    %c0_6 = arith.constant 0 : index
    %7 = vector.load %arg4[%c0_5, %c0_6] : memref<256x32xf32, #tpu.memory_space<vmem>>, vector<256x32xf32>
    tpu.vector_store %arg4[%c0_5, %c0_6], %6 {strides = array<i32>} : memref<256x32xf32, #tpu.memory_space<vmem>>, vector<256x32xf32>,
    return
  }
  func.func @transform_0(%arg0: i32) -> (i32, i32) {
    %c0_i32 = arith.constant 0 : i32
    %c0_i32_0 = arith.constant 0 : i32
    return %arg0, %c0_i32 : i32, i32
  }
  func.func @transform_1(%arg0: i32) -> (i32, i32) {
    %c0_i32 = arith.constant 0 : i32
    %c0_i32_0 = arith.constant 0 : i32
    %c0_i32_1 = arith.constant 0 : i32
    return %c0_i32, %c0_i32_0 : i32, i32
  }
  func.func @transform_2(%arg0: i32) -> (i32, i32) {
    %c0_i32 = arith.constant 0 : i32
    %c0_i32_0 = arith.constant 0 : i32
    %c0_i32_1 = arith.constant 0 : i32
    return %c0_i32, %c0_i32_0 : i32, i32
  }
  func.func @transform_3(%arg0: i32) -> (i32, i32) {
    %c0_i32 = arith.constant 0 : i32
    %c0_i32_0 = arith.constant 0 : i32
    return %arg0, %c0_i32 : i32, i32
  }
}

</mosaic_0001>

<llo_original>
// kernel: tpu_custom_call.1
$region0: #{tpu_custom_call.1}
  #allocation0 [shape = 'u32[]', space=smem, size = 0x4, offset = 0x4, fixed_abs, tag = 'smem constant byte address 0x4 - core index']
  #allocation1 [shape = 'u32[144,128]{1,0:T(1,128)}', space=vmem, size = 0x12000, scoped, tag = 'internal scratch']
  %s0 = inlined_call_operand.vmem [shape: f32[512,5], index: 0, kind: input, shape index: {}]
  %s1 = inlined_call_operand.vmem [shape: bf16[5,32], index: 1, kind: input, shape index: {}]
  %s2 = inlined_call_operand.vmem [shape: f32[1,32], index: 2, kind: input, shape index: {}]
  %s3 = inlined_call_operand.vmem [shape: f32[512,32], index: 3, kind: output, shape index: {}]
  %s4 = sld [smem:[#allocation0]]
  $region45: #{tpu_custom_call.1} parent=0
    _
  %s6 = ssub.s32 1, %s4
  %s7 = scalar_select 0, %s6, %s4
  loop: start=0, step=1, limit=4
  $region2: #{tpu_custom_call.1} parent=0 // loop_pre_header
    _
  $region3: #{tpu_custom_call.1} parent=0 // loop_header
    %s9 = sphi 0, %s13
    %p10 = scmp.ge.s32.totalorder %s9, 4
    %s19 = sphi 0, %s21
    %s22 = sphi 0, %s19
    %s23 = sphi 0, %s22
    %s39 = sphi 0, %s23
    %s43 = sphi 0, %s43
    %s45 = sphi 0, %s43
    %s46 = sphi 0, %s45
    %s60 = sphi 0, %s46
    %s64 = sphi 0, %s64
    %s66 = sphi 0, %s64
    %s67 = sphi 0, %s66
    %s81 = sphi 0, %s67
    %s87 = sphi 0, %s89
    %s90 = sphi 0, %s87
    %s91 = sphi 0, %s90
    %s107 = sphi 0, %s91
  $region4: #{tpu_custom_call.1} parent=0 // loop_header_branch
    %12 = sbr.rel (%p10) target = $region8
  $region5: #{tpu_custom_call.1} parent=0 // loop_body
    %s14 = ssub.s32 %s9, 1
    %s15 = ssub.s32 %s9, 2
    %s16 = sadd.s32 %s9, 1
    %s17 = ssub.s32 %s9, %s16
    %p18 = scmp.eq.s32.totalorder %s17, 0
    %s20 = sadd.s32 %s19, 1
    %s21 = scalar_select %p18, %s19, %s20
    %p24 = pneg %p18
    %p25 = scmp.eq.s32.totalorder %s9, 1
    %p26 = por %p24, %p25
    %p27 = scmp.ne.s32.totalorder %s19, %s22
    %p28 = scmp.eq.s32.totalorder %s9, 0
    %p29 = por %p27, %p28
    %p30 = scmp.ne.s32.totalorder %s19, %s22
    %p31 = scmp.eq.s32.totalorder %s14, 1
    %p32 = por %p30, %p31
    %p33 = scmp.ne.s32.totalorder %s22, %s23
    %p34 = scmp.eq.s32.totalorder %s14, 0
    %p35 = por %p33, %p34
    %p36 = scmp.ne.s32.totalorder %s22, %s23
    %p37 = scmp.eq.s32.totalorder %s15, 1
    %p38 = por %p36, %p37
    %p40 = scmp.ne.s32.totalorder %s23, %s39
    %p41 = scmp.eq.s32.totalorder %s15, 0
    %p42 = por %p40, %p41
    %s44 = sadd.s32 %s43, 1
    %p47 = scmp.eq.s32.totalorder %s9, 1
    %p48 = scmp.ne.s32.totalorder %s43, %s45
    %p49 = scmp.eq.s32.totalorder %s9, 0
    %p50 = por %p48, %p49
    %p51 = scmp.ne.s32.totalorder %s43, %s45
    %p52 = scmp.eq.s32.totalorder %s14, 1
    %p53 = por %p51, %p52
    %p54 = scmp.ne.s32.totalorder %s45, %s46
    %p55 = scmp.eq.s32.totalorder %s14, 0
    %p56 = por %p54, %p55
    %p57 = scmp.ne.s32.totalorder %s45, %s46
    %p58 = scmp.eq.s32.totalorder %s15, 1
    %p59 = por %p57, %p58
    %p61 = scmp.ne.s32.totalorder %s46, %s60
    %p62 = scmp.eq.s32.totalorder %s15, 0
    %p63 = por %p61, %p62
    %s65 = sadd.s32 %s64, 1
    %p68 = scmp.eq.s32.totalorder %s9, 1
    %p69 = scmp.ne.s32.totalorder %s64, %s66
    %p70 = scmp.eq.s32.totalorder %s9, 0
    %p71 = por %p69, %p70
    %p72 = scmp.ne.s32.totalorder %s64, %s66
    %p73 = scmp.eq.s32.totalorder %s14, 1
    %p74 = por %p72, %p73
    %p75 = scmp.ne.s32.totalorder %s66, %s67
    %p76 = scmp.eq.s32.totalorder %s14, 0
    %p77 = por %p75, %p76
    %p78 = scmp.ne.s32.totalorder %s66, %s67
    %p79 = scmp.eq.s32.totalorder %s15, 1
    %p80 = por %p78, %p79
    %p82 = scmp.ne.s32.totalorder %s67, %s81
    %p83 = scmp.eq.s32.totalorder %s15, 0
    %p84 = por %p82, %p83
    %s85 = ssub.s32 %s9, %s16
    %p86 = scmp.eq.s32.totalorder %s85, 0
    %s88 = sadd.s32 %s87, 1
    %s89 = scalar_select %p86, %s87, %s88
    %p92 = pneg %p86
    %p93 = scmp.eq.s32.totalorder %s9, 1
    %p94 = por %p92, %p93
    %p95 = scmp.ne.s32.totalorder %s87, %s90
    %p96 = scmp.eq.s32.totalorder %s9, 0
    %p97 = por %p95, %p96
    %p98 = scmp.ne.s32.totalorder %s87, %s90
    %p99 = scmp.eq.s32.totalorder %s14, 1
    %p100 = por %p98, %p99
    %p101 = scmp.ne.s32.totalorder %s90, %s91
    %p102 = scmp.eq.s32.totalorder %s14, 0
    %p103 = por %p101, %p102
    %p104 = scmp.ne.s32.totalorder %s90, %s91
    %p105 = scmp.eq.s32.totalorder %s15, 1
    %p106 = por %p104, %p105
    %p108 = scmp.ne.s32.totalorder %s91, %s107
    %p109 = scmp.eq.s32.totalorder %s15, 0
    %p110 = por %p108, %p109
    %p111 = scmp.le.s32.totalorder 1, %s9
    %p112 = scmp.lt.s32.totalorder %s9, 3
    %p113 = pnand %p111, %p112
    %p114 = pneg %p113
    // Predicated region
    $region9: #{tpu_custom_call.1} parent=5 // pred_check
      _
    $region10: #{tpu_custom_call.1} parent=5 // pred_check_branch
      %116 = sbr.rel (%p113) target = $region12
    $region11: #{tpu_custom_call.1} parent=5 // pred_region
      %s117 = ssub.s32 %s9, 1
      // Predicated region
      $region13: #{tpu_custom_call.1} parent=11 // pred_check
        %p118 = pneg %p56
      $region14: #{tpu_custom_call.1} parent=11 // pred_check_branch
        %120 = sbr.rel (%p118) target = $region16
      $region15: #{tpu_custom_call.1} parent=11 // pred_region
        _
      $region16: #{tpu_custom_call.1} parent=11 // pred_fallthru
        _
      // Predicated region
      $region17: #{tpu_custom_call.1} parent=11 // pred_check
        %p121 = pneg %p77
      $region18: #{tpu_custom_call.1} parent=11 // pred_check_branch
        %123 = sbr.rel (%p121) target = $region20
      $region19: #{tpu_custom_call.1} parent=11 // pred_region
        _
      $region20: #{tpu_custom_call.1} parent=11 // pred_fallthru
        _
    $region12: #{tpu_custom_call.1} parent=5 // pred_fallthru
      _
    %p124 = scmp.lt.s32.totalorder %s9, 2
    // Predicated region
    $region21: #{tpu_custom_call.1} parent=5 // pred_check
      %p125 = pneg %p124
    $region22: #{tpu_custom_call.1} parent=5 // pred_check_branch
      %127 = sbr.rel (%p125) target = $region24
    $region23: #{tpu_custom_call.1} parent=5 // pred_region
      // Predicated region
      $region25: #{tpu_custom_call.1} parent=23 // pred_check
        %p128 = pneg %p29
      $region26: #{tpu_custom_call.1} parent=23 // pred_check_branch
        %130 = sbr.rel (%p128) target = $region28
      $region27: #{tpu_custom_call.1} parent=23 // pred_region
        %s131 = smul.u32 32, %s9
        %p132 = scmp.lt.s32.totalorder %s131, 63
        %s133 = scalar_select %p132, %s131, 63
        %s134 = smul.addr %s133, 8
        %s135 = scalar_lea.vmem %s0, %s134
        %s136 = smul.u32 32, %s9
      $region28: #{tpu_custom_call.1} parent=23 // pred_fallthru
        _
    $region24: #{tpu_custom_call.1} parent=5 // pred_fallthru
      _
    %p137 = scmp.le.s32.totalorder 1, %s9
    %p138 = scmp.lt.s32.totalorder %s9, 3
    %p139 = pnand %p137, %p138
    %p140 = pneg %p139
    // Predicated region
    $region29: #{tpu_custom_call.1} parent=5 // pred_check
      _
    $region30: #{tpu_custom_call.1} parent=5 // pred_check_branch
      %142 = sbr.rel (%p139) target = $region32
    $region31: #{tpu_custom_call.1} parent=5 // pred_region
      %s143 = ssub.s32 %s9, 1
      %s144 = smul.u32 32, %s14
      %p145 = scmp.lt.s32.totalorder %s144, 63
      %s146 = scalar_select %p145, %s144, 63
      %s147 = smul.addr %s146, 8
      %s148 = scalar_lea.vmem %s0, %s147
      %p149 = pneg %p35
      %p150 = pneg %p32
      %p151 = pneg %p56
      %p152 = pneg %p53
      %p153 = pneg %p77
      %p154 = pneg %p74
      %p155 = pneg %p103
      %p156 = pneg %p100
      %s157 = smul.u32 32, %s14
      %p158 = scmp.lt.s32.totalorder %s157, 63
      %s159 = scalar_select %p158, %s157, 63
      %s160 = smul.addr %s159, 8
      %s161 = scalar_lea.vmem %s3, %s160
      %s162 = smul.u32 32, %s14
      %p163 = scmp.lt.s32.totalorder %s162, 63
      %s164 = scalar_select %p163, %s162, 63
      %s165 = smul.addr %s164, 8
      %s166 = scalar_lea.vmem %s0, %s165
      %s167 = smul.u32 32, %s14
      %s168 = smul.u32 32, %s14
      %p169 = scmp.lt.s32.totalorder %s168, 63
      %s170 = scalar_select %p169, %s168, 63
      %s171 = smul.addr %s170, 8
      %s172 = scalar_lea.vmem %s3, %s171
      %s173 = smul.u32 32, %s14
      %v175 = vld [vmem:[%s166] sm:$0xff]
      %v176 = vld [vmem:[%s166 + $0x8] sm:$0xff]
      %v177 = vld [vmem:[%s166 + $0x10] sm:$0xff]
      %v178 = vld [vmem:[%s166 + $0x18] sm:$0xff]
      %v179 = vld [vmem:[%s166 + $0x20] sm:$0xff]
      %v180 = vld [vmem:[%s166 + $0x28] sm:$0xff]
      %v181 = vld [vmem:[%s166 + $0x30] sm:$0xff]
      %v182 = vld [vmem:[%s166 + $0x38] sm:$0xff]
      %v183 = vld [vmem:[%s166 + $0x40] sm:$0xff]
      %v184 = vld [vmem:[%s166 + $0x48] sm:$0xff]
      %v185 = vld [vmem:[%s166 + $0x50] sm:$0xff]
      %v186 = vld [vmem:[%s166 + $0x58] sm:$0xff]
      %v187 = vld [vmem:[%s166 + $0x60] sm:$0xff]
      %v188 = vld [vmem:[%s166 + $0x68] sm:$0xff]
      %v189 = vld [vmem:[%s166 + $0x70] sm:$0xff]
      %v190 = vld [vmem:[%s166 + $0x78] sm:$0xff]
      %v191 = vld [vmem:[%s166 + $0x80] sm:$0xff]
      %v192 = vld [vmem:[%s166 + $0x88] sm:$0xff]
      %v193 = vld [vmem:[%s166 + $0x90] sm:$0xff]
      %v194 = vld [vmem:[%s166 + $0x98] sm:$0xff]
      %v195 = vld [vmem:[%s166 + $0xa0] sm:$0xff]
      %v196 = vld [vmem:[%s166 + $0xa8] sm:$0xff]
      %v197 = vld [vmem:[%s166 + $0xb0] sm:$0xff]
      %v198 = vld [vmem:[%s166 + $0xb8] sm:$0xff]
      %v199 = vld [vmem:[%s166 + $0xc0] sm:$0xff]
      %v200 = vld [vmem:[%s166 + $0xc8] sm:$0xff]
      %v201 = vld [vmem:[%s166 + $0xd0] sm:$0xff]
      %v202 = vld [vmem:[%s166 + $0xd8] sm:$0xff]
      %v203 = vld [vmem:[%s166 + $0xe0] sm:$0xff]
      %v204 = vld [vmem:[%s166 + $0xe8] sm:$0xff]
      %v205 = vld [vmem:[%s166 + $0xf0] sm:$0xff]
      %v206 = vld [vmem:[%s166 + $0xf8] sm:$0xff]
      %v207 = vpack.c.bf16 %v176, %v175
      %v208 = vpack.c.bf16 %v178, %v177
      %v209 = vpack.c.bf16 %v180, %v179
      %v210 = vpack.c.bf16 %v182, %v181
      %v211 = vpack.c.bf16 %v184, %v183
      %v212 = vpack.c.bf16 %v186, %v185
      %v213 = vpack.c.bf16 %v188, %v187
      %v214 = vpack.c.bf16 %v190, %v189
      %v215 = vpack.c.bf16 %v192, %v191
      %v216 = vpack.c.bf16 %v194, %v193
      %v217 = vpack.c.bf16 %v196, %v195
      %v218 = vpack.c.bf16 %v198, %v197
      %v219 = vpack.c.bf16 %v200, %v199
      %v220 = vpack.c.bf16 %v202, %v201
      %v221 = vpack.c.bf16 %v204, %v203
      %v222 = vpack.c.bf16 %v206, %v205
      %v223 = vld [vmem:[%s1] sm:$0x7]
      %v224 = vld [vmem:[%s2] sm:$0x1]
      %v226 = vlaneseq
      %v227 = vshrl.u32 %v226, 7
      %v228 = vsub.s32 0, %v227
      %v229 = vrot.slane %v224, %v228
      %vm231 = vcmask 39936
      %v233 = vsel %vm231, %v207, 0
      %v236 = vsel %vm231, %v208, 0
      %v239 = vsel %vm231, %v209, 0
      %v242 = vsel %vm231, %v210, 0
      %v245 = vsel %vm231, %v211, 0
      %v248 = vsel %vm231, %v212, 0
      %v251 = vsel %vm231, %v213, 0
      %v254 = vsel %vm231, %v214, 0
      %v257 = vsel %vm231, %v215, 0
      %v260 = vsel %vm231, %v216, 0
      %v263 = vsel %vm231, %v217, 0
      %v266 = vsel %vm231, %v218, 0
      %v269 = vsel %vm231, %v219, 0
      %v272 = vsel %vm231, %v220, 0
      %v275 = vsel %vm231, %v221, 0
      %v278 = vsel %vm231, %v222, 0
      %vm280 = vcmask 1041408
      %vm281 = vcmask 1042432
      %v282 = vsel %vm280, 4294967295, 65535
      %v283 = vsel %vm281, %v282, 0
      %v285 = vand.u32 %v223, %v283
      %287 = vmatprep.subr.bf16.mxu0 0
      %288 = vmatpush1.bf16.msra.mxu0 %v285
      %289 = vmatprep.subr.bf16.mxu0 0
      %290 = vmatpush1.bf16.msra.mxu0 0
      %291 = vmatprep.subr.bf16.mxu0 0
      %292 = vmatpush1.bf16.msra.mxu0 0
      %293 = vmatprep.subr.bf16.mxu0 0
      %294 = vmatpush1.bf16.msra.mxu0 0
      %295 = vmatprep.subr.bf16.mxu0 0
      %296 = vmatpush1.bf16.msra.mxu0 0
      %297 = vmatprep.subr.bf16.mxu0 0
      %298 = vmatpush1.bf16.msra.mxu0 0
      %299 = vmatprep.subr.bf16.mxu0 0
      %300 = vmatpush1.bf16.msra.mxu0 0
      %301 = vmatprep.subr.bf16.mxu0 0
      %302 = vmatpush1.bf16.msra.mxu0 0
      %303 = vmatprep.subr.bf16.mxu0 0
      %304 = vmatpush1.bf16.msra.mxu0 0
      %305 = vmatprep.subr.bf16.mxu0 0
      %306 = vmatpush1.bf16.msra.mxu0 0
      %307 = vmatprep.subr.bf16.mxu0 0
      %308 = vmatpush1.bf16.msra.mxu0 0
      %309 = vmatprep.subr.bf16.mxu0 0
      %310 = vmatpush1.bf16.msra.mxu0 0
      %311 = vmatprep.subr.bf16.mxu0 0
      %312 = vmatpush1.bf16.msra.mxu0 0
      %313 = vmatprep.subr.bf16.mxu0 0
      %314 = vmatpush1.bf16.msra.mxu0 0
      %315 = vmatprep.subr.bf16.mxu0 0
      %316 = vmatpush1.bf16.msra.mxu0 0
      %317 = vmatprep.subr.bf16.mxu0 0
      %318 = vmatpush1.bf16.msra.mxu0 0
      %319 = vmatprep.mubr.bf16.mxu0 0
      %320 = vmatmul.mubr.bf16.gmra.mrb[0].mxu0 %v233
      %v321 = vpop.f32.mrb[0].mxu0
      %v322 = vadd.f32 %v229, %v321
      %v323 = vpop.f32.mrb[0].mxu0
      %v324 = vpop.f32.mrb[0].mxu0
      %v325 = vadd.f32 %v229, %v324
      %v326 = vpop.f32.mrb[0].mxu0
      %327 = vmatprep.mubr.bf16.mxu0 0
      %328 = vmatmul.mubr.bf16.gmra.mrb[0].mxu0 %v236
      %v329 = vpop.f32.mrb[0].mxu0
      %v330 = vadd.f32 %v229, %v329
      %v331 = vpop.f32.mrb[0].mxu0
      %v332 = vpop.f32.mrb[0].mxu0
      %v333 = vadd.f32 %v229, %v332
      %v334 = vpop.f32.mrb[0].mxu0
      %335 = vmatprep.mubr.bf16.mxu0 0
      %336 = vmatmul.mubr.bf16.gmra.mrb[0].mxu0 %v239
      %v337 = vpop.f32.mrb[0].mxu0
      %v338 = vadd.f32 %v229, %v337
      %v339 = vpop.f32.mrb[0].mxu0
      %v340 = vpop.f32.mrb[0].mxu0
      %v341 = vadd.f32 %v229, %v340
      %v342 = vpop.f32.mrb[0].mxu0
      %343 = vmatprep.mubr.bf16.mxu0 0
      %344 = vmatmul.mubr.bf16.gmra.mrb[0].mxu0 %v242
      %v345 = vpop.f32.mrb[0].mxu0
      %v346 = vadd.f32 %v229, %v345
      %v347 = vpop.f32.mrb[0].mxu0
      %v348 = vpop.f32.mrb[0].mxu0
      %v349 = vadd.f32 %v229, %v348
      %v350 = vpop.f32.mrb[0].mxu0
      %351 = vmatprep.mubr.bf16.mxu0 0
      %352 = vmatmul.mubr.bf16.gmra.mrb[0].mxu0 %v245
      %v353 = vpop.f32.mrb[0].mxu0
      %v354 = vadd.f32 %v229, %v353
      %v355 = vpop.f32.mrb[0].mxu0
      %v356 = vpop.f32.mrb[0].mxu0
      %v357 = vadd.f32 %v229, %v356
      %v358 = vpop.f32.mrb[0].mxu0
      %359 = vmatprep.mubr.bf16.mxu0 0
      %360 = vmatmul.mubr.bf16.gmra.mrb[0].mxu0 %v248
      %v361 = vpop.f32.mrb[0].mxu0
      %v362 = vadd.f32 %v229, %v361
      %v363 = vpop.f32.mrb[0].mxu0
      %v364 = vpop.f32.mrb[0].mxu0
      %v365 = vadd.f32 %v229, %v364
      %v366 = vpop.f32.mrb[0].mxu0
      %367 = vmatprep.mubr.bf16.mxu0 0
      %368 = vmatmul.mubr.bf16.gmra.mrb[0].mxu0 %v251
      %v369 = vpop.f32.mrb[0].mxu0
      %v370 = vadd.f32 %v229, %v369
      %v371 = vpop.f32.mrb[0].mxu0
      %v372 = vpop.f32.mrb[0].mxu0
      %v373 = vadd.f32 %v229, %v372
      %v374 = vpop.f32.mrb[0].mxu0
      %375 = vmatprep.mubr.bf16.mxu0 0
      %376 = vmatmul.mubr.bf16.gmra.mrb[0].mxu0 %v254
      %v377 = vpop.f32.mrb[0].mxu0
      %v378 = vadd.f32 %v229, %v377
      %v379 = vpop.f32.mrb[0].mxu0
      %v380 = vpop.f32.mrb[0].mxu0
      %v381 = vadd.f32 %v229, %v380
      %v382 = vpop.f32.mrb[0].mxu0
      %383 = vmatprep.mubr.bf16.mxu0 0
      %384 = vmatmul.mubr.bf16.gmra.mrb[0].mxu0 %v257
      %v385 = vpop.f32.mrb[0].mxu0
      %v386 = vadd.f32 %v229, %v385
      %v387 = vpop.f32.mrb[0].mxu0
      %v388 = vpop.f32.mrb[0].mxu0
      %v389 = vadd.f32 %v229, %v388
      %v390 = vpop.f32.mrb[0].mxu0
      %391 = vmatprep.mubr.bf16.mxu0 0
      %392 = vmatmul.mubr.bf16.gmra.mrb[0].mxu0 %v260
      %v393 = vpop.f32.mrb[0].mxu0
      %v394 = vadd.f32 %v229, %v393
      %v395 = vpop.f32.mrb[0].mxu0
      %v396 = vpop.f32.mrb[0].mxu0
      %v397 = vadd.f32 %v229, %v396
      %v398 = vpop.f32.mrb[0].mxu0
      %399 = vmatprep.mubr.bf16.mxu0 0
      %400 = vmatmul.mubr.bf16.gmra.mrb[0].mxu0 %v263
      %v401 = vpop.f32.mrb[0].mxu0
      %v402 = vadd.f32 %v229, %v401
      %v403 = vpop.f32.mrb[0].mxu0
      %v404 = vpop.f32.mrb[0].mxu0
      %v405 = vadd.f32 %v229, %v404
      %v406 = vpop.f32.mrb[0].mxu0
      %407 = vmatprep.mubr.bf16.mxu0 0
      %408 = vmatmul.mubr.bf16.gmra.mrb[0].mxu0 %v266
      %v409 = vpop.f32.mrb[0].mxu0
      %v410 = vadd.f32 %v229, %v409
      %v411 = vpop.f32.mrb[0].mxu0
      %v412 = vpop.f32.mrb[0].mxu0
      %v413 = vadd.f32 %v229, %v412
      %v414 = vpop.f32.mrb[0].mxu0
      %415 = vmatprep.mubr.bf16.mxu0 0
      %416 = vmatmul.mubr.bf16.gmra.mrb[0].mxu0 %v269
      %v417 = vpop.f32.mrb[0].mxu0
      %v418 = vadd.f32 %v229, %v417
      %v419 = vpop.f32.mrb[0].mxu0
      %v420 = vpop.f32.mrb[0].mxu0
      %v421 = vadd.f32 %v229, %v420
      %v422 = vpop.f32.mrb[0].mxu0
      %423 = vmatprep.mubr.bf16.mxu0 0
      %424 = vmatmul.mubr.bf16.gmra.mrb[0].mxu0 %v272
      %v425 = vpop.f32.mrb[0].mxu0
      %v426 = vadd.f32 %v229, %v425
      %v427 = vpop.f32.mrb[0].mxu0
      %v428 = vpop.f32.mrb[0].mxu0
      %v429 = vadd.f32 %v229, %v428
      %v430 = vpop.f32.mrb[0].mxu0
      %431 = vmatprep.mubr.bf16.mxu0 0
      %432 = vmatmul.mubr.bf16.gmra.mrb[0].mxu0 %v275
      %v433 = vpop.f32.mrb[0].mxu0
      %v434 = vadd.f32 %v229, %v433
      %v435 = vpop.f32.mrb[0].mxu0
      %v436 = vpop.f32.mrb[0].mxu0
      %v437 = vadd.f32 %v229, %v436
      %v438 = vpop.f32.mrb[0].mxu0
      %439 = vmatprep.mubr.bf16.mxu0 0
      %440 = vmatmul.mubr.bf16.gmra.mrb[0].mxu0 %v278
      %v441 = vpop.f32.mrb[0].mxu0
      %v442 = vadd.f32 %v229, %v441
      %v443 = vpop.f32.mrb[0].mxu0
      %v444 = vpop.f32.mrb[0].mxu0
      %v445 = vadd.f32 %v229, %v444
      %v446 = vpop.f32.mrb[0].mxu0
      %447 = vdwg.mxu0
      %vm448 = vcmask 261120
      %449 = vst.msk [vmem:[%s172] sm:$0xff] %vm448, %v322
      %450 = vst.msk [vmem:[%s172 + $0x8] sm:$0xff] %vm448, %v325
      %451 = vst.msk [vmem:[%s172 + $0x10] sm:$0xff] %vm448, %v330
      %452 = vst.msk [vmem:[%s172 + $0x18] sm:$0xff] %vm448, %v333
      %453 = vst.msk [vmem:[%s172 + $0x20] sm:$0xff] %vm448, %v338
      %454 = vst.msk [vmem:[%s172 + $0x28] sm:$0xff] %vm448, %v341
      %455 = vst.msk [vmem:[%s172 + $0x30] sm:$0xff] %vm448, %v346
      %456 = vst.msk [vmem:[%s172 + $0x38] sm:$0xff] %vm448, %v349
      %457 = vst.msk [vmem:[%s172 + $0x40] sm:$0xff] %vm448, %v354
      %458 = vst.msk [vmem:[%s172 + $0x48] sm:$0xff] %vm448, %v357
      %459 = vst.msk [vmem:[%s172 + $0x50] sm:$0xff] %vm448, %v362
      %460 = vst.msk [vmem:[%s172 + $0x58] sm:$0xff] %vm448, %v365
      %461 = vst.msk [vmem:[%s172 + $0x60] sm:$0xff] %vm448, %v370
      %462 = vst.msk [vmem:[%s172 + $0x68] sm:$0xff] %vm448, %v373
      %463 = vst.msk [vmem:[%s172 + $0x70] sm:$0xff] %vm448, %v378
      %464 = vst.msk [vmem:[%s172 + $0x78] sm:$0xff] %vm448, %v381
      %465 = vst.msk [vmem:[%s172 + $0x80] sm:$0xff] %vm448, %v386
      %466 = vst.msk [vmem:[%s172 + $0x88] sm:$0xff] %vm448, %v389
      %467 = vst.msk [vmem:[%s172 + $0x90] sm:$0xff] %vm448, %v394
      %468 = vst.msk [vmem:[%s172 + $0x98] sm:$0xff] %vm448, %v397
      %469 = vst.msk [vmem:[%s172 + $0xa0] sm:$0xff] %vm448, %v402
      %470 = vst.msk [vmem:[%s172 + $0xa8] sm:$0xff] %vm448, %v405
      %471 = vst.msk [vmem:[%s172 + $0xb0] sm:$0xff] %vm448, %v410
      %472 = vst.msk [vmem:[%s172 + $0xb8] sm:$0xff] %vm448, %v413
      %473 = vst.msk [vmem:[%s172 + $0xc0] sm:$0xff] %vm448, %v418
      %474 = vst.msk [vmem:[%s172 + $0xc8] sm:$0xff] %vm448, %v421
      %475 = vst.msk [vmem:[%s172 + $0xd0] sm:$0xff] %vm448, %v426
      %476 = vst.msk [vmem:[%s172 + $0xd8] sm:$0xff] %vm448, %v429
      %477 = vst.msk [vmem:[%s172 + $0xe0] sm:$0xff] %vm448, %v434
      %478 = vst.msk [vmem:[%s172 + $0xe8] sm:$0xff] %vm448, %v437
      %479 = vst.msk [vmem:[%s172 + $0xf0] sm:$0xff] %vm448, %v442
      %480 = vst.msk [vmem:[%s172 + $0xf8] sm:$0xff] %vm448, %v445
      %s481 = smul.u32 32, %s14
      %p482 = scmp.lt.s32.totalorder %s481, 63
      %s483 = scalar_select %p482, %s481, 63
      %s484 = smul.addr %s483, 8
      %s485 = scalar_lea.vmem %s3, %s484
      // Predicated region
      $region33: #{tpu_custom_call.1} parent=31 // pred_check
        %p486 = pneg %p100
      $region34: #{tpu_custom_call.1} parent=31 // pred_check_branch
        %488 = sbr.rel (%p486) target = $region36
      $region35: #{tpu_custom_call.1} parent=31 // pred_region
        %s489 = smul.u32 32, %s14
      $region36: #{tpu_custom_call.1} parent=31 // pred_fallthru
        _
    $region32: #{tpu_custom_call.1} parent=5 // pred_fallthru
      _
    %p490 = scmp.le.s32.totalorder 2, %s9
    // Predicated region
    $region37: #{tpu_custom_call.1} parent=5 // pred_check
      %p491 = pneg %p490
    $region38: #{tpu_custom_call.1} parent=5 // pred_check_branch
      %493 = sbr.rel (%p491) target = $region40
    $region39: #{tpu_custom_call.1} parent=5 // pred_region
      %s494 = ssub.s32 %s9, 2
      // Predicated region
      $region41: #{tpu_custom_call.1} parent=39 // pred_check
        %p495 = pneg %p106
      $region42: #{tpu_custom_call.1} parent=39 // pred_check_branch
        %497 = sbr.rel (%p495) target = $region44
      $region43: #{tpu_custom_call.1} parent=39 // pred_region
        %s498 = smul.u32 32, %s15
        %p499 = scmp.lt.s32.totalorder %s498, 63
        %s500 = scalar_select %p499, %s498, 63
        %s501 = smul.addr %s500, 8
        %s502 = scalar_lea.vmem %s3, %s501
      $region44: #{tpu_custom_call.1} parent=39 // pred_fallthru
        _
    $region40: #{tpu_custom_call.1} parent=5 // pred_fallthru
      _
  $region6: #{tpu_custom_call.1} parent=0 // loop_footer
    %s13 = sadd.s32 1, %s9
  $region7: #{tpu_custom_call.1} parent=0 // loop_footer_branch
    %8 = sbr.rel target = $region3
  $region8: #{tpu_custom_call.1} parent=0 // loop_exit
    _

</llo_original>
